<compile_context>
chip_gen: v7x
topology: tpu7x:2x2x1
jax: 0.10.0
libtpu: 0.0.40
codegen_flags: <defaults>
</compile_context>

<pallas_src>
import functools

import jax
import jax.numpy as jnp
from jax.experimental import pallas as pl
from jax.experimental.pallas import tpu as pltpu


# Safe on v5e/v6e (128 MiB physical VMEM) and v7x (64 MiB per TC).
_VMEM_LIMIT_BYTES = 48 * 1024 * 1024


# ----------------------------------------------------------------------------
# Fused matmul kernel: out = maybe_relu((x @ w) * scale + bias)
#   x: bf16 (tm, K), w: bf16 (K, tn), scale/bias: f32 (1, tn), f32 accumulate.
# ----------------------------------------------------------------------------
def _fused_matmul_kernel(x_ref, w_ref, s_ref, b_ref, o_ref, *, apply_relu):
    acc = jnp.dot(x_ref[...], w_ref[...], preferred_element_type=jnp.float32)
    acc = acc * s_ref[...] + b_ref[...]
    if apply_relu:
        acc = jnp.maximum(acc, 0.0)
    o_ref[...] = acc.astype(o_ref.dtype)


def _pick_tn(K, N, *, cap_bytes=4 * 1024 * 1024):
    """Lane-aligned output-channel tile with a bf16 weight-block byte cap."""
    if N % 128 != 0:
        return N
    for cand in (512, 256, 128):
        if N % cand == 0 and K * cand * 2 <= cap_bytes:
            return cand
    return 128


def _pick_tm(M):
    for cand in (512, 256, 128, 8):
        if M % cand == 0:
            return cand
    return M


def fused_linear(x, w, scale, bias, *, relu, out_dtype=jnp.bfloat16):
    """x: (M, K), w: (K, N), scale/bias: (N,) -> (M, N). bf16 MXU, f32 acc."""
    M, K = x.shape
    K2, N = w.shape
    assert K == K2
    x = x.astype(jnp.bfloat16)
    w = w.astype(jnp.bfloat16)
    scale2 = scale.reshape(1, N).astype(jnp.float32)
    bias2 = bias.reshape(1, N).astype(jnp.float32)

    tm = _pick_tm(M)
    tn = _pick_tn(K, N)
    kernel = functools.partial(_fused_matmul_kernel, apply_relu=relu)

    return pl.pallas_call(
        kernel,
        out_shape=jax.ShapeDtypeStruct((M, N), out_dtype),
        grid_spec=pltpu.PrefetchScalarGridSpec(
            num_scalar_prefetch=0,
            grid=(M // tm, N // tn),
            in_specs=[
                pl.BlockSpec((tm, K), lambda i, j: (i, 0)),   # activation tile
                pl.BlockSpec((K, tn), lambda i, j: (0, j)),   # weight tile
                pl.BlockSpec((1, tn), lambda i, j: (0, j)),   # per-channel scale
                pl.BlockSpec((1, tn), lambda i, j: (0, j)),   # per-channel bias
            ],
            out_specs=pl.BlockSpec((tm, tn), lambda i, j: (i, j)),
        ),
        compiler_params=pltpu.CompilerParams(
            dimension_semantics=("parallel", "parallel"),
            vmem_limit_bytes=_VMEM_LIMIT_BYTES),
    )(x, w, scale2, bias2)


# ----------------------------------------------------------------------------
# Fused Conv3x3 (stride 1, pad 1) + BN + ReLU kernel.
# The zero-padded image is passed flattened row-major as ((H+2)*(W+2)+8, Cin);
# output flat position q = h*(W+2) + w gets sum_t x[q + dh*(W+2)+dw] @ W[t].
# Columns w >= W of the output are junk and are dropped by the caller.
# ----------------------------------------------------------------------------
def _conv3x3_kernel(x_ref, w_ref, s_ref, b_ref, o_ref, *, wp):
    # x_ref: (P_pad, Cin) bf16; w_ref: (9, Cin, tn) bf16; s/b: (1, tn) f32.
    L, tn = o_ref.shape
    acc = jnp.zeros((L, tn), jnp.float32)
    for t in range(9):                      # static, unrolled: 9 shifted matmuls
        off = (t // 3) * wp + (t % 3)
        xt = x_ref[pl.ds(off, L), :]
        acc = acc + jnp.dot(xt, w_ref[t], preferred_element_type=jnp.float32)
    y = acc * s_ref[...] + b_ref[...]
    y = jnp.maximum(y, 0.0)
    o_ref[...] = y.astype(o_ref.dtype)


def _pad_and_flatten(x):
    """(N, H, W, C) -> (N, (H+2)*(W+2) + 8, C) zero-padded, row-major flat.

    The 8 extra rows absorb the over-read of the junk output columns on the
    last image row (reads land in zeros and only affect discarded outputs).
    """
    N, H, W, C = x.shape
    xp = jnp.pad(x, ((0, 0), (1, 1), (1, 1), (0, 0)))
    flat = xp.reshape(N, (H + 2) * (W + 2), C)
    return jnp.pad(flat, ((0, 0), (0, 8), (0, 0)))


def _pick_conv_tn(cin, cout, *, cap_bytes=6 * 1024 * 1024):
    if cout % 128 != 0:
        return cout
    tn = cout
    while tn > 128 and 9 * cin * tn * 2 > cap_bytes:
        tn //= 2
    return tn


def conv3x3_bn_relu(x, w, scale, bias):
    """x: (N,H,W,Cin) bf16; w: (9,Cin,Cout) bf16 -> (N, H, W+2, Cout) bf16.

    Output columns >= W are junk (by-product of the flattened-padded trick).
    """
    # TODO(synk): for large img_size the per-image block and (H*(W+2), tn)
    # accumulator should be row-band tiled; fine at the small shapes used here.
    N, H, W, Cin = x.shape
    Cout = w.shape[-1]
    Wp = W + 2
    L = H * Wp
    xf = _pad_and_flatten(x.astype(jnp.bfloat16))
    Pp = xf.shape[1]
    tn = _pick_conv_tn(Cin, Cout)
    scale2 = scale.reshape(1, Cout).astype(jnp.float32)
    bias2 = bias.reshape(1, Cout).astype(jnp.float32)

    y = pl.pallas_call(
        functools.partial(_conv3x3_kernel, wp=Wp),
        out_shape=jax.ShapeDtypeStruct((N, L, Cout), jnp.bfloat16),
        grid_spec=pltpu.PrefetchScalarGridSpec(
            num_scalar_prefetch=0,
            grid=(N, Cout // tn),
            in_specs=[
                pl.BlockSpec((None, Pp, Cin), lambda b, j: (b, 0, 0)),  # image
                pl.BlockSpec((9, Cin, tn), lambda b, j: (0, 0, j)),     # weights
                pl.BlockSpec((1, tn), lambda b, j: (0, j)),             # scale
                pl.BlockSpec((1, tn), lambda b, j: (0, j)),             # bias
            ],
            out_specs=pl.BlockSpec((None, L, tn), lambda b, j: (b, 0, j)),
        ),
        compiler_params=pltpu.CompilerParams(
            dimension_semantics=("parallel", "parallel"),
            vmem_limit_bytes=_VMEM_LIMIT_BYTES),
    )(xf, w.astype(jnp.bfloat16), scale2, bias2)
    return y.reshape(N, H, Wp, Cout)


# ----------------------------------------------------------------------------
# MaxPool 2x2 stride 2.  Input is the conv output in (N, H, Wy, C) form where
# columns >= valid_w are junk.  The JAX-side reshape is a pure reinterpretation
# (free); the kernel does the 4-way max with integer-indexed loads + lane slices.
# ----------------------------------------------------------------------------
def _maxpool_kernel(x_ref, o_ref, *, c):
    # x_ref: (Hh, 2, Wq, 2*C); o_ref: (Hh, Wo, C) with Wo <= Wq.
    top = x_ref[:, 0, :, :]                       # (Hh, Wq, 2C)
    bot = x_ref[:, 1, :, :]
    m = jnp.maximum(top, bot)                     # row-pair max
    m = jnp.maximum(m[:, :, :c], m[:, :, c:])     # col-pair max -> (Hh, Wq, C)
    wo = o_ref.shape[1]
    o_ref[...] = m[:, :wo, :]


def maxpool2x2(y, valid_w):
    """y: (N, H, Wy, C), cols >= valid_w junk -> (N, H//2, valid_w//2, C)."""
    N, H, Wy, C = y.shape
    Hh, Wq, Wo = H // 2, Wy // 2, valid_w // 2
    y5 = y.reshape(N, Hh, 2, Wq, 2 * C)           # free reshape (split/merge)
    return pl.pallas_call(
        functools.partial(_maxpool_kernel, c=C),
        out_shape=jax.ShapeDtypeStruct((N, Hh, Wo, C), y.dtype),
        grid_spec=pltpu.PrefetchScalarGridSpec(
            num_scalar_prefetch=0,
            grid=(N,),
            in_specs=[pl.BlockSpec((None, Hh, 2, Wq, 2 * C),
                                   lambda b: (b, 0, 0, 0, 0))],
            out_specs=pl.BlockSpec((None, Hh, Wo, C), lambda b: (b, 0, 0, 0)),
        ),
        compiler_params=pltpu.CompilerParams(
            dimension_semantics=("parallel",),
            vmem_limit_bytes=_VMEM_LIMIT_BYTES),
    )(y5)


# ----------------------------------------------------------------------------
# im2col glue for the first conv only (Cin=3 -> K=27), plain JAX, tiny.
# ----------------------------------------------------------------------------
def im2col_3x3(x):
    """x: (N, H, W, C) -> (N*H*W, 9*C), tap order (kh, kw, cin)."""
    N, H, W, C = x.shape
    xp = jnp.pad(x, ((0, 0), (1, 1), (1, 1), (0, 0)))
    cols = [xp[:, dh:dh + H, dw:dw + W, :] for dh in range(3) for dw in range(3)]
    p = jnp.stack(cols, axis=3)          # (N, H, W, 9, C)
    return p.reshape(N * H * W, 9 * C)


# ----------------------------------------------------------------------------
# Deterministic parameter construction (matches the nn.Module shapes)
# ----------------------------------------------------------------------------
def init_params(key, img_size=32, input_channel=3, num_class=3):
    conv_cfg = [(input_channel, 64), (64, 64), (64, 128), (128, 128),
                (128, 256), (256, 256), (256, 256), (256, 256),
                (256, 512), (512, 512), (512, 512), (512, 512),
                (512, 512), (512, 512), (512, 512), (512, 512)]
    pool_after = {1, 3, 7, 11, 15}   # conv2, conv4, conv8, conv12, conv16
    eps = 1e-5

    convs = []
    for i, (cin, cout) in enumerate(conv_cfg):
        key, k1, k2 = jax.random.split(key, 3)
        fan_in = 9 * cin
        # weight stored as (9, cin, cout) in (kh, kw, cin) tap order, bf16
        w = (jax.random.normal(k1, (9, cin, cout), jnp.float32)
             * jnp.sqrt(2.0 / fan_in)).astype(jnp.bfloat16)
        b_conv = jax.random.normal(k2, (cout,), jnp.float32) * 0.01
        # BatchNorm2d eval mode: gamma=1, beta=0, running_mean=0, running_var=1
        gamma = jnp.ones((cout,), jnp.float32)
        beta = jnp.zeros((cout,), jnp.float32)
        r_mean = jnp.zeros((cout,), jnp.float32)
        r_var = jnp.ones((cout,), jnp.float32)
        scale = gamma / jnp.sqrt(r_var + eps)
        bias = (b_conv - r_mean) * scale + beta
        convs.append({"w": w, "scale": scale, "bias": bias, "pool": i in pool_after})

    flat = int(512 * img_size * img_size / 32 / 32)
    fc_cfg = [(flat, 4096), (4096, 4096), (4096, num_class)]
    fcs = []
    for i, (fin, fout) in enumerate(fc_cfg):
        key, k1, k2 = jax.random.split(key, 3)
        w = (jax.random.normal(k1, (fin, fout), jnp.float32)
             * jnp.sqrt(2.0 / fin)).astype(jnp.bfloat16)
        b = jax.random.normal(k2, (fout,), jnp.float32) * 0.01
        fcs.append({"w": w, "b": b, "relu": i < 2})

    return {"convs": convs, "fcs": fcs}


# ----------------------------------------------------------------------------
# Forward pass
# ----------------------------------------------------------------------------
def vgg_forward(params, x_nchw):
    # torch gives NCHW; kernels use NHWC, bf16 activations
    x = jnp.transpose(x_nchw, (0, 2, 3, 1)).astype(jnp.bfloat16)

    convs = params["convs"]

    # conv1: Cin=3 (K=27) -> tiny im2col + fused matmul keeps lane layout sane.
    c0 = convs[0]
    N, H, W, Cin = x.shape
    cout0 = c0["w"].shape[-1]
    patches = im2col_3x3(x)                                  # (N*H*W, 27) bf16
    y = fused_linear(patches, c0["w"].reshape(9 * Cin, cout0),
                     c0["scale"], c0["bias"], relu=True)
    x = y.reshape(N, H, W, cout0)
    if c0["pool"]:
        x = maxpool2x2(x, valid_w=W)

    # conv2..conv16: fused conv+BN+ReLU (9 shifted in-VMEM matmuls) + pooling.
    for layer in convs[1:]:
        N, H, W, _ = x.shape
        y = conv3x3_bn_relu(x, layer["w"], layer["scale"], layer["bias"])
        if layer["pool"]:
            x = maxpool2x2(y, valid_w=W)
        else:
            x = y[:, :, :W, :]

    # flatten in NCHW order to match torch's x.view(N, -1)
    N = x.shape[0]
    out = jnp.transpose(x, (0, 3, 1, 2)).reshape(N, -1)

    fcs = params["fcs"]
    for i, fc in enumerate(fcs):
        cout = fc["w"].shape[1]
        ones = jnp.ones((cout,), jnp.float32)
        last = i == len(fcs) - 1
        out = fused_linear(out, fc["w"], ones, fc["b"], relu=fc["relu"],
                           out_dtype=jnp.float32 if last else jnp.bfloat16)
        # TODO(synk): Dropout(p=0.5) is identity here (inference mode); training-mode
        # Bernoulli masking and BatchNorm batch-statistics are not emulated.
    return out


if __name__ == "__main__":
    key = jax.random.PRNGKey(0)
    kp, kx = jax.random.split(key)

    # Small shapes consistent with the module: img_size must be divisible by 32
    batch, in_ch, img_size, num_class = 2, 3, 32, 3
    params = init_params(kp, img_size=img_size, input_channel=in_ch,
                         num_class=num_class)
    x = jax.random.normal(kx, (batch, in_ch, img_size, img_size), jnp.float32)

    out = vgg_forward(params, x)
    out = jax.block_until_ready(out)
    assert out.shape == (batch, num_class), out.shape
    assert bool(jnp.all(jnp.isfinite(out)))
    print("KERNEL_OK")
</pallas_src>

<mosaic_0001>
module attributes {stable_mosaic.version = 11 : i64} {
  func.func @_fused_matmul_kernel(%arg0: i32, %arg1: i32, %arg2: memref<512x27xbf16, #tpu.memory_space<vmem>>, %arg3: memref<27x64xbf16, #tpu.memory_space<vmem>>, %arg4: memref<1x64xf32, #tpu.memory_space<vmem>>, %arg5: memref<1x64xf32, #tpu.memory_space<vmem>>, %arg6: memref<512x64xbf16, #tpu.memory_space<vmem>>) attributes {dimension_semantics = [#tpu.dimension_semantics<parallel>, #tpu.dimension_semantics<parallel>], iteration_bounds = array<i64: 4, 1>, scalar_prefetch = 0 : i64, scratch_operands = 0 : i64, tpu.core_type = #tpu.core_type<tc>, window_params = [{transform_indices = @transform_0, window_bounds = array<i64: 512, 27>}, {transform_indices = @transform_1, window_bounds = array<i64: 27, 64>}, {transform_indices = @transform_2, window_bounds = array<i64: 1, 64>}, {transform_indices = @transform_3, window_bounds = array<i64: 1, 64>}, {transform_indices = @transform_4, window_bounds = array<i64: 512, 64>}]} {
    %c0 = arith.constant 0 : index
    %c0_0 = arith.constant 0 : index
    %0 = vector.load %arg2[%c0, %c0_0] : memref<512x27xbf16, #tpu.memory_space<vmem>>, vector<512x27xbf16>
    %c0_1 = arith.constant 0 : index
    %c0_2 = arith.constant 0 : index
    %1 = vector.load %arg3[%c0_1, %c0_2] : memref<27x64xbf16, #tpu.memory_space<vmem>>, vector<27x64xbf16>
    %cst = arith.constant dense<0.000000e+00> : vector<512x64xf32>
    %2 = tpu.matmul %0, %1, %cst {dimension_numbers = #tpu.dot_dimension_numbers<[1], [0], [0], [1], [0, 0, 1, 1], [], []>} : vector<512x27xbf16>, vector<27x64xbf16>, vector<512x64xf32> -> vector<512x64xf32>
    %c0_3 = arith.constant 0 : index
    %c0_4 = arith.constant 0 : index
    %3 = vector.load %arg4[%c0_3, %c0_4] : memref<1x64xf32, #tpu.memory_space<vmem>>, vector<1x64xf32>
    %4 = vector.broadcast %3 : vector<1x64xf32> to vector<512x64xf32>
    %5 = arith.mulf %2, %4 : vector<512x64xf32>
    %c0_5 = arith.constant 0 : index
    %c0_6 = arith.constant 0 : index
    %6 = vector.load %arg5[%c0_5, %c0_6] : memref<1x64xf32, #tpu.memory_space<vmem>>, vector<1x64xf32>
    %7 = vector.broadcast %6 : vector<1x64xf32> to vector<512x64xf32>
    %8 = arith.addf %5, %7 : vector<512x64xf32>
    %cst_7 = arith.constant 0.000000e+00 : f32
    %9 = vector.broadcast %cst_7 : f32 to vector<512x64xf32>
    %10 = arith.maximumf %8, %9 : vector<512x64xf32>
    %11 = arith.truncf %10 : vector<512x64xf32> to vector<512x64xbf16>
    %c0_8 = arith.constant 0 : index
    %c0_9 = arith.constant 0 : index
    %12 = vector.load %arg6[%c0_8, %c0_9] : memref<512x64xbf16, #tpu.memory_space<vmem>>, vector<512x64xbf16>
    tpu.vector_store %arg6[%c0_8, %c0_9], %11 {strides = array<i32>} : memref<512x64xbf16, #tpu.memory_space<vmem>>, vector<512x64xbf16>,
    return
  }
  func.func @transform_0(%arg0: i32, %arg1: i32) -> (i32, i32) {
    %c0_i32 = arith.constant 0 : i32
    %c0_i32_0 = arith.constant 0 : i32
    return %arg0, %c0_i32 : i32, i32
  }
  func.func @transform_1(%arg0: i32, %arg1: i32) -> (i32, i32) {
    %c0_i32 = arith.constant 0 : i32
    %c0_i32_0 = arith.constant 0 : i32
    return %c0_i32, %arg1 : i32, i32
  }
  func.func @transform_2(%arg0: i32, %arg1: i32) -> (i32, i32) {
    %c0_i32 = arith.constant 0 : i32
    %c0_i32_0 = arith.constant 0 : i32
    return %c0_i32, %arg1 : i32, i32
  }
  func.func @transform_3(%arg0: i32, %arg1: i32) -> (i32, i32) {
    %c0_i32 = arith.constant 0 : i32
    %c0_i32_0 = arith.constant 0 : i32
    return %c0_i32, %arg1 : i32, i32
  }
  func.func @transform_4(%arg0: i32, %arg1: i32) -> (i32, i32) {
    %c0_i32 = arith.constant 0 : i32
    return %arg0, %arg1 : i32, i32
  }
}

</mosaic_0001>

<llo_original>
// kernel: tpu_custom_call.1
$region0: #{tpu_custom_call.1}
  #allocation0 [shape = 'u32[]', space=smem, size = 0x4, offset = 0x4, fixed_abs, tag = 'smem constant byte address 0x4 - core index']
  #allocation1 [shape = 'u32[144,128]{1,0:T(1,128)}', space=vmem, size = 0x12000, scoped, tag = 'internal scratch']
  %s0 = inlined_call_operand.vmem [shape: bf16[2048,27], index: 0, kind: input, shape index: {}]
  %s1 = inlined_call_operand.vmem [shape: bf16[27,64], index: 1, kind: input, shape index: {}]
  %s2 = inlined_call_operand.vmem [shape: f32[1,64], index: 2, kind: input, shape index: {}]
  %s3 = inlined_call_operand.vmem [shape: f32[1,64], index: 3, kind: input, shape index: {}]
  %s4 = inlined_call_operand.vmem [shape: bf16[2048,64], index: 4, kind: output, shape index: {}]
  %s5 = sld [smem:[#allocation0]]
  $region49: #{tpu_custom_call.1} parent=0
    _
  %s7 = ssub.s32 1, %s5
  %s8 = scalar_select 0, %s7, %s5
  loop: start=0, step=1, limit=6
  $region2: #{tpu_custom_call.1} parent=0 // loop_pre_header
    _
  $region3: #{tpu_custom_call.1} parent=0 // loop_header
    %s10 = sphi 0, %s14
    %p11 = scmp.ge.s32.totalorder %s10, 6
    %s17 = sphi 0, %s29
    %s18 = sphi 0, %s25
    %s19 = sphi 0, %s17
    %s20 = sphi 0, %s18
    %s21 = sphi 0, %s19
    %s22 = sphi 0, %s20
    %s32 = sphi 0, %s34
    %s35 = sphi 0, %s32
    %s36 = sphi 0, %s35
    %s52 = sphi 0, %s36
    %s58 = sphi 0, %s60
    %s61 = sphi 0, %s58
    %s62 = sphi 0, %s61
    %s78 = sphi 0, %s62
    %s84 = sphi 0, %s86
    %s87 = sphi 0, %s84
    %s88 = sphi 0, %s87
    %s104 = sphi 0, %s88
    %s110 = sphi 0, %s112
    %s113 = sphi 0, %s110
    %s114 = sphi 0, %s113
    %s130 = sphi 0, %s114
    %s138 = sphi 0, %s140
    %s141 = sphi 0, %s138
    %s142 = sphi 0, %s141
    %s158 = sphi 0, %s142
  $region4: #{tpu_custom_call.1} parent=0 // loop_header_branch
    %13 = sbr.rel (%p11) target = $region8
  $region5: #{tpu_custom_call.1} parent=0 // loop_body
    %s15 = ssub.s32 %s10, 1
    %s16 = ssub.s32 %s10, 2
    %s23 = sadd.s32 1, %s18
    %p24 = scmp.ge.s32.totalorder %s23, 1
    %s25 = scalar_select %p24, 0, %s23
    %s26 = sadd.s32 1, %s17
    %s27 = scalar_select %p24, %s26, %s17
    %p28 = scmp.ge.s32.totalorder %s27, 4
    %s29 = scalar_select %p28, 0, %s27
    %s30 = ssub.s32 %s17, %s29
    %p31 = scmp.eq.s32.totalorder %s30, 0
    %s33 = sadd.s32 %s32, 1
    %s34 = scalar_select %p31, %s32, %s33
    %p37 = pneg %p31
    %p38 = scmp.eq.s32.totalorder %s10, 3
    %p39 = por %p37, %p38
    %p40 = scmp.ne.s32.totalorder %s32, %s35
    %p41 = scmp.eq.s32.totalorder %s10, 0
    %p42 = por %p40, %p41
    %p43 = scmp.ne.s32.totalorder %s32, %s35
    %p44 = scmp.eq.s32.totalorder %s15, 3
    %p45 = por %p43, %p44
    %p46 = scmp.ne.s32.totalorder %s35, %s36
    %p47 = scmp.eq.s32.totalorder %s15, 0
    %p48 = por %p46, %p47
    %p49 = scmp.ne.s32.totalorder %s35, %s36
    %p50 = scmp.eq.s32.totalorder %s16, 3
    %p51 = por %p49, %p50
    %p53 = scmp.ne.s32.totalorder %s36, %s52
    %p54 = scmp.eq.s32.totalorder %s16, 0
    %p55 = por %p53, %p54
    %s56 = ssub.s32 %s18, %s25
    %p57 = scmp.eq.s32.totalorder %s56, 0
    %s59 = sadd.s32 %s58, 1
    %s60 = scalar_select %p57, %s58, %s59
    %p63 = pneg %p57
    %p64 = scmp.eq.s32.totalorder %s10, 3
    %p65 = por %p63, %p64
    %p66 = scmp.ne.s32.totalorder %s58, %s61
    %p67 = scmp.eq.s32.totalorder %s10, 0
    %p68 = por %p66, %p67
    %p69 = scmp.ne.s32.totalorder %s58, %s61
    %p70 = scmp.eq.s32.totalorder %s15, 3
    %p71 = por %p69, %p70
    %p72 = scmp.ne.s32.totalorder %s61, %s62
    %p73 = scmp.eq.s32.totalorder %s15, 0
    %p74 = por %p72, %p73
    %p75 = scmp.ne.s32.totalorder %s61, %s62
    %p76 = scmp.eq.s32.totalorder %s16, 3
    %p77 = por %p75, %p76
    %p79 = scmp.ne.s32.totalorder %s62, %s78
    %p80 = scmp.eq.s32.totalorder %s16, 0
    %p81 = por %p79, %p80
    %s82 = ssub.s32 %s18, %s25
    %p83 = scmp.eq.s32.totalorder %s82, 0
    %s85 = sadd.s32 %s84, 1
    %s86 = scalar_select %p83, %s84, %s85
    %p89 = pneg %p83
    %p90 = scmp.eq.s32.totalorder %s10, 3
    %p91 = por %p89, %p90
    %p92 = scmp.ne.s32.totalorder %s84, %s87
    %p93 = scmp.eq.s32.totalorder %s10, 0
    %p94 = por %p92, %p93
    %p95 = scmp.ne.s32.totalorder %s84, %s87
    %p96 = scmp.eq.s32.totalorder %s15, 3
    %p97 = por %p95, %p96
    %p98 = scmp.ne.s32.totalorder %s87, %s88
    %p99 = scmp.eq.s32.totalorder %s15, 0
    %p100 = por %p98, %p99
    %p101 = scmp.ne.s32.totalorder %s87, %s88
    %p102 = scmp.eq.s32.totalorder %s16, 3
    %p103 = por %p101, %p102
    %p105 = scmp.ne.s32.totalorder %s88, %s104
    %p106 = scmp.eq.s32.totalorder %s16, 0
    %p107 = por %p105, %p106
    %s108 = ssub.s32 %s18, %s25
    %p109 = scmp.eq.s32.totalorder %s108, 0
    %s111 = sadd.s32 %s110, 1
    %s112 = scalar_select %p109, %s110, %s111
    %p115 = pneg %p109
    %p116 = scmp.eq.s32.totalorder %s10, 3
    %p117 = por %p115, %p116
    %p118 = scmp.ne.s32.totalorder %s110, %s113
    %p119 = scmp.eq.s32.totalorder %s10, 0
    %p120 = por %p118, %p119
    %p121 = scmp.ne.s32.totalorder %s110, %s113
    %p122 = scmp.eq.s32.totalorder %s15, 3
    %p123 = por %p121, %p122
    %p124 = scmp.ne.s32.totalorder %s113, %s114
    %p125 = scmp.eq.s32.totalorder %s15, 0
    %p126 = por %p124, %p125
    %p127 = scmp.ne.s32.totalorder %s113, %s114
    %p128 = scmp.eq.s32.totalorder %s16, 3
    %p129 = por %p127, %p128
    %p131 = scmp.ne.s32.totalorder %s114, %s130
    %p132 = scmp.eq.s32.totalorder %s16, 0
    %p133 = por %p131, %p132
    %s134 = ssub.s32 %s17, %s29
    %s135 = ssub.s32 %s18, %s25
    %s136 = sor.u32 %s134, %s135
    %p137 = scmp.eq.s32.totalorder %s136, 0
    %s139 = sadd.s32 %s138, 1
    %s140 = scalar_select %p137, %s138, %s139
    %p143 = pneg %p137
    %p144 = scmp.eq.s32.totalorder %s10, 3
    %p145 = por %p143, %p144
    %p146 = scmp.ne.s32.totalorder %s138, %s141
    %p147 = scmp.eq.s32.totalorder %s10, 0
    %p148 = por %p146, %p147
    %p149 = scmp.ne.s32.totalorder %s138, %s141
    %p150 = scmp.eq.s32.totalorder %s15, 3
    %p151 = por %p149, %p150
    %p152 = scmp.ne.s32.totalorder %s141, %s142
    %p153 = scmp.eq.s32.totalorder %s15, 0
    %p154 = por %p152, %p153
    %p155 = scmp.ne.s32.totalorder %s141, %s142
    %p156 = scmp.eq.s32.totalorder %s16, 3
    %p157 = por %p155, %p156
    %p159 = scmp.ne.s32.totalorder %s142, %s158
    %p160 = scmp.eq.s32.totalorder %s16, 0
    %p161 = por %p159, %p160
    %p162 = scmp.le.s32.totalorder 1, %s10
    %p163 = scmp.lt.s32.totalorder %s10, 5
    %p164 = pnand %p162, %p163
    %p165 = pneg %p164
    // Predicated region
    $region9: #{tpu_custom_call.1} parent=5 // pred_check
      _
    $region10: #{tpu_custom_call.1} parent=5 // pred_check_branch
      %167 = sbr.rel (%p164) target = $region12
    $region11: #{tpu_custom_call.1} parent=5 // pred_region
      %s168 = ssub.s32 %s10, 1
      // Predicated region
      $region13: #{tpu_custom_call.1} parent=11 // pred_check
        %p169 = pneg %p74
      $region14: #{tpu_custom_call.1} parent=11 // pred_check_branch
        %171 = sbr.rel (%p169) target = $region16
      $region15: #{tpu_custom_call.1} parent=11 // pred_region
        %p172 = scmp.lt.s32.totalorder %s20, 0
        %s173 = scalar_select %p172, %s20, 0
        %s174 = smul.addr %s173, 4
        %s175 = scalar_lea.vmem %s1, %s174
      $region16: #{tpu_custom_call.1} parent=11 // pred_fallthru
        _
      // Predicated region
      $region17: #{tpu_custom_call.1} parent=11 // pred_check
        %p176 = pneg %p100
      $region18: #{tpu_custom_call.1} parent=11 // pred_check_branch
        %178 = sbr.rel (%p176) target = $region20
      $region19: #{tpu_custom_call.1} parent=11 // pred_region
        %p179 = scmp.lt.s32.totalorder %s20, 0
        %s180 = scalar_select %p179, %s20, 0
        %s181 = scalar_lea.vmem %s2, %s180
      $region20: #{tpu_custom_call.1} parent=11 // pred_fallthru
        _
      // Predicated region
      $region21: #{tpu_custom_call.1} parent=11 // pred_check
        %p182 = pneg %p126
      $region22: #{tpu_custom_call.1} parent=11 // pred_check_branch
        %184 = sbr.rel (%p182) target = $region24
      $region23: #{tpu_custom_call.1} parent=11 // pred_region
        %p185 = scmp.lt.s32.totalorder %s20, 0
        %s186 = scalar_select %p185, %s20, 0
        %s187 = scalar_lea.vmem %s3, %s186
      $region24: #{tpu_custom_call.1} parent=11 // pred_fallthru
        _
    $region12: #{tpu_custom_call.1} parent=5 // pred_fallthru
      _
    %p188 = scmp.lt.s32.totalorder %s10, 4
    // Predicated region
    $region25: #{tpu_custom_call.1} parent=5 // pred_check
      %p189 = pneg %p188
    $region26: #{tpu_custom_call.1} parent=5 // pred_check_branch
      %191 = sbr.rel (%p189) target = $region28
    $region27: #{tpu_custom_call.1} parent=5 // pred_region
      // Predicated region
      $region29: #{tpu_custom_call.1} parent=27 // pred_check
        %p192 = pneg %p42
      $region30: #{tpu_custom_call.1} parent=27 // pred_check_branch
        %194 = sbr.rel (%p192) target = $region32
      $region31: #{tpu_custom_call.1} parent=27 // pred_region
        %s195 = smul.u32 64, %s17
        %p196 = scmp.lt.s32.totalorder %s195, 255
        %s197 = scalar_select %p196, %s195, 255
        %s198 = smul.addr %s197, 4
        %s199 = scalar_lea.vmem %s0, %s198
        %s200 = smul.u32 64, %s17
      $region32: #{tpu_custom_call.1} parent=27 // pred_fallthru
        _
    $region28: #{tpu_custom_call.1} parent=5 // pred_fallthru
      _
    %p201 = scmp.le.s32.totalorder 1, %s10
    %p202 = scmp.lt.s32.totalorder %s10, 5
    %p203 = pnand %p201, %p202
    %p204 = pneg %p203
    // Predicated region
    $region33: #{tpu_custom_call.1} parent=5 // pred_check
      _
    $region34: #{tpu_custom_call.1} parent=5 // pred_check_branch
      %206 = sbr.rel (%p203) target = $region36
    $region35: #{tpu_custom_call.1} parent=5 // pred_region
      %s207 = ssub.s32 %s10, 1
      %s208 = smul.u32 64, %s19
      %p209 = scmp.lt.s32.totalorder %s208, 255
      %s210 = scalar_select %p209, %s208, 255
      %s211 = smul.addr %s210, 4
      %s212 = scalar_lea.vmem %s0, %s211
      %p213 = pneg %p48
      %p214 = pneg %p45
      %p215 = scmp.lt.s32.totalorder %s20, 0
      %s216 = scalar_select %p215, %s20, 0
      %s217 = smul.addr %s216, 4
      %s218 = scalar_lea.vmem %s1, %s217
      %p219 = pneg %p74
      %p220 = pneg %p71
      %p221 = scmp.lt.s32.totalorder %s20, 0
      %s222 = scalar_select %p221, %s20, 0
      %s223 = scalar_lea.vmem %s2, %s222
      %p224 = pneg %p100
      %p225 = pneg %p97
      %p226 = scmp.lt.s32.totalorder %s20, 0
      %s227 = scalar_select %p226, %s20, 0
      %s228 = scalar_lea.vmem %s3, %s227
      %p229 = pneg %p126
      %p230 = pneg %p123
      %p231 = pneg %p154
      %p232 = pneg %p151
      %s233 = smul.u32 64, %s19
      %p234 = scmp.lt.s32.totalorder %s233, 255
      %s235 = scalar_select %p234, %s233, 255
      %p236 = scmp.lt.s32.totalorder %s20, 0
      %s237 = scalar_select %p236, %s20, 0
      %s238 = sadd.s32 %s237, %s235
      %s239 = smul.addr %s238, 4
      %s240 = scalar_lea.vmem %s4, %s239
      %s241 = smul.u32 64, %s19
      %p242 = scmp.lt.s32.totalorder %s241, 255
      %s243 = scalar_select %p242, %s241, 255
      %s244 = smul.addr %s243, 4
      %s245 = scalar_lea.vmem %s0, %s244
      %s246 = smul.u32 64, %s19
      %p247 = scmp.lt.s32.totalorder %s20, 0
      %s248 = scalar_select %p247, %s20, 0
      %s249 = smul.addr %s248, 4
      %s250 = scalar_lea.vmem %s1, %s249
      %p251 = scmp.lt.s32.totalorder %s20, 0
      %s252 = scalar_select %p251, %s20, 0
      %s253 = scalar_lea.vmem %s2, %s252
      %p254 = scmp.lt.s32.totalorder %s20, 0
      %s255 = scalar_select %p254, %s20, 0
      %s256 = scalar_lea.vmem %s3, %s255
      %s257 = smul.u32 64, %s19
      %p258 = scmp.lt.s32.totalorder %s257, 255
      %s259 = scalar_select %p258, %s257, 255
      %p260 = scmp.lt.s32.totalorder %s20, 0
      %s261 = scalar_select %p260, %s20, 0
      %s262 = sadd.s32 %s261, %s259
      %s263 = smul.addr %s262, 4
      %s264 = scalar_lea.vmem %s4, %s263
      %s265 = smul.u32 64, %s19
      %v267 = vld [vmem:[%s245] sm:$0xf]
      %v268 = vld [vmem:[%s245 + $0x4] sm:$0xf]
      %v269 = vld [vmem:[%s245 + $0x8] sm:$0xf]
      %v270 = vld [vmem:[%s245 + $0xc] sm:$0xf]
      %v271 = vld [vmem:[%s245 + $0x10] sm:$0xf]
      %v272 = vld [vmem:[%s245 + $0x14] sm:$0xf]
      %v273 = vld [vmem:[%s245 + $0x18] sm:$0xf]
      %v274 = vld [vmem:[%s245 + $0x1c] sm:$0xf]
      %v275 = vld [vmem:[%s245 + $0x20] sm:$0xf]
      %v276 = vld [vmem:[%s245 + $0x24] sm:$0xf]
      %v277 = vld [vmem:[%s245 + $0x28] sm:$0xf]
      %v278 = vld [vmem:[%s245 + $0x2c] sm:$0xf]
      %v279 = vld [vmem:[%s245 + $0x30] sm:$0xf]
      %v280 = vld [vmem:[%s245 + $0x34] sm:$0xf]
      %v281 = vld [vmem:[%s245 + $0x38] sm:$0xf]
      %v282 = vld [vmem:[%s245 + $0x3c] sm:$0xf]
      %v283 = vld [vmem:[%s245 + $0x40] sm:$0xf]
      %v284 = vld [vmem:[%s245 + $0x44] sm:$0xf]
      %v285 = vld [vmem:[%s245 + $0x48] sm:$0xf]
      %v286 = vld [vmem:[%s245 + $0x4c] sm:$0xf]
      %v287 = vld [vmem:[%s245 + $0x50] sm:$0xf]
      %v288 = vld [vmem:[%s245 + $0x54] sm:$0xf]
      %v289 = vld [vmem:[%s245 + $0x58] sm:$0xf]
      %v290 = vld [vmem:[%s245 + $0x5c] sm:$0xf]
      %v291 = vld [vmem:[%s245 + $0x60] sm:$0xf]
      %v292 = vld [vmem:[%s245 + $0x64] sm:$0xf]
      %v293 = vld [vmem:[%s245 + $0x68] sm:$0xf]
      %v294 = vld [vmem:[%s245 + $0x6c] sm:$0xf]
      %v295 = vld [vmem:[%s245 + $0x70] sm:$0xf]
      %v296 = vld [vmem:[%s245 + $0x74] sm:$0xf]
      %v297 = vld [vmem:[%s245 + $0x78] sm:$0xf]
      %v298 = vld [vmem:[%s245 + $0x7c] sm:$0xf]
      %v299 = vld [vmem:[%s245 + $0x80] sm:$0xf]
      %v300 = vld [vmem:[%s245 + $0x84] sm:$0xf]
      %v301 = vld [vmem:[%s245 + $0x88] sm:$0xf]
      %v302 = vld [vmem:[%s245 + $0x8c] sm:$0xf]
      %v303 = vld [vmem:[%s245 + $0x90] sm:$0xf]
      %v304 = vld [vmem:[%s245 + $0x94] sm:$0xf]
      %v305 = vld [vmem:[%s245 + $0x98] sm:$0xf]
      %v306 = vld [vmem:[%s245 + $0x9c] sm:$0xf]
      %v307 = vld [vmem:[%s245 + $0xa0] sm:$0xf]
      %v308 = vld [vmem:[%s245 + $0xa4] sm:$0xf]
      %v309 = vld [vmem:[%s245 + $0xa8] sm:$0xf]
      %v310 = vld [vmem:[%s245 + $0xac] sm:$0xf]
      %v311 = vld [vmem:[%s245 + $0xb0] sm:$0xf]
      %v312 = vld [vmem:[%s245 + $0xb4] sm:$0xf]
      %v313 = vld [vmem:[%s245 + $0xb8] sm:$0xf]
      %v314 = vld [vmem:[%s245 + $0xbc] sm:$0xf]
      %v315 = vld [vmem:[%s245 + $0xc0] sm:$0xf]
      %v316 = vld [vmem:[%s245 + $0xc4] sm:$0xf]
      %v317 = vld [vmem:[%s245 + $0xc8] sm:$0xf]
      %v318 = vld [vmem:[%s245 + $0xcc] sm:$0xf]
      %v319 = vld [vmem:[%s245 + $0xd0] sm:$0xf]
      %v320 = vld [vmem:[%s245 + $0xd4] sm:$0xf]
      %v321 = vld [vmem:[%s245 + $0xd8] sm:$0xf]
      %v322 = vld [vmem:[%s245 + $0xdc] sm:$0xf]
      %v323 = vld [vmem:[%s245 + $0xe0] sm:$0xf]
      %v324 = vld [vmem:[%s245 + $0xe4] sm:$0xf]
      %v325 = vld [vmem:[%s245 + $0xe8] sm:$0xf]
      %v326 = vld [vmem:[%s245 + $0xec] sm:$0xf]
      %v327 = vld [vmem:[%s245 + $0xf0] sm:$0xf]
      %v328 = vld [vmem:[%s245 + $0xf4] sm:$0xf]
      %v329 = vld [vmem:[%s245 + $0xf8] sm:$0xf]
      %v330 = vld [vmem:[%s245 + $0xfc] sm:$0xf]
      %v331 = vld [vmem:[%s250] sm:$0xf]
      %v332 = vld [vmem:[%s250 + $0x4] sm:$0xf]
      %v333 = vld [vmem:[%s250 + $0x8] sm:$0xf]
      %v334 = vld [vmem:[%s250 + $0xc] sm:$0x3]
      %v399 = vunpack.c.l.b16 %v267
      %v400 = vunpack.c.l.b16 %v268
      %v401 = vunpack.c.l.b16 %v269
      %v402 = vunpack.c.l.b16 %v270
      %v403 = vunpack.c.l.b16 %v271
      %v404 = vunpack.c.l.b16 %v272
      %v405 = vunpack.c.l.b16 %v273
      %v406 = vunpack.c.l.b16 %v274
      %v407 = vunpack.c.l.b16 %v275
      %v408 = vunpack.c.l.b16 %v276
      %v409 = vunpack.c.l.b16 %v277
      %v410 = vunpack.c.l.b16 %v278
      %v411 = vunpack.c.l.b16 %v279
      %v412 = vunpack.c.l.b16 %v280
      %v413 = vunpack.c.l.b16 %v281
      %v414 = vunpack.c.l.b16 %v282
      %v415 = vunpack.c.l.b16 %v283
      %v416 = vunpack.c.l.b16 %v284
      %v417 = vunpack.c.l.b16 %v285
      %v418 = vunpack.c.l.b16 %v286
      %v419 = vunpack.c.l.b16 %v287
      %v420 = vunpack.c.l.b16 %v288
      %v421 = vunpack.c.l.b16 %v289
      %v422 = vunpack.c.l.b16 %v290
      %v423 = vunpack.c.l.b16 %v291
      %v424 = vunpack.c.l.b16 %v292
      %v425 = vunpack.c.l.b16 %v293
      %v426 = vunpack.c.l.b16 %v294
      %v427 = vunpack.c.l.b16 %v295
      %v428 = vunpack.c.l.b16 %v296
      %v429 = vunpack.c.l.b16 %v297
      %v430 = vunpack.c.l.b16 %v298
      %v431 = vunpack.c.l.b16 %v299
      %v432 = vunpack.c.l.b16 %v300
      %v433 = vunpack.c.l.b16 %v301
      %v434 = vunpack.c.l.b16 %v302
      %v435 = vunpack.c.l.b16 %v303
      %v436 = vunpack.c.l.b16 %v304
      %v437 = vunpack.c.l.b16 %v305
      %v438 = vunpack.c.l.b16 %v306
      %v439 = vunpack.c.l.b16 %v307
      %v440 = vunpack.c.l.b16 %v308
      %v441 = vunpack.c.l.b16 %v309
      %v442 = vunpack.c.l.b16 %v310
      %v443 = vunpack.c.l.b16 %v311
      %v444 = vunpack.c.l.b16 %v312
      %v445 = vunpack.c.l.b16 %v313
      %v446 = vunpack.c.l.b16 %v314
      %v447 = vunpack.c.l.b16 %v315
      %v448 = vunpack.c.l.b16 %v316
      %v449 = vunpack.c.l.b16 %v317
      %v450 = vunpack.c.l.b16 %v318
      %v451 = vunpack.c.l.b16 %v319
      %v452 = vunpack.c.l.b16 %v320
      %v453 = vunpack.c.l.b16 %v321
      %v454 = vunpack.c.l.b16 %v322
      %v455 = vunpack.c.l.b16 %v323
      %v456 = vunpack.c.l.b16 %v324
      %v457 = vunpack.c.l.b16 %v325
      %v458 = vunpack.c.l.b16 %v326
      %v459 = vunpack.c.l.b16 %v327
      %v460 = vunpack.c.l.b16 %v328
      %v461 = vunpack.c.l.b16 %v329
      %v462 = vunpack.c.l.b16 %v330
      %v463 = vpack.c.b16 %v400, %v399
      %v464 = vpack.c.b16 %v402, %v401
      %v465 = vpack.c.b16 %v404, %v403
      %v466 = vpack.c.b16 %v406, %v405
      %v467 = vpack.c.b16 %v408, %v407
      %v468 = vpack.c.b16 %v410, %v409
      %v469 = vpack.c.b16 %v412, %v411
      %v470 = vpack.c.b16 %v414, %v413
      %v471 = vpack.c.b16 %v416, %v415
      %v472 = vpack.c.b16 %v418, %v417
      %v473 = vpack.c.b16 %v420, %v419
      %v474 = vpack.c.b16 %v422, %v421
      %v475 = vpack.c.b16 %v424, %v423
      %v476 = vpack.c.b16 %v426, %v425
      %v477 = vpack.c.b16 %v428, %v427
      %v478 = vpack.c.b16 %v430, %v429
      %v479 = vpack.c.b16 %v432, %v431
      %v480 = vpack.c.b16 %v434, %v433
      %v481 = vpack.c.b16 %v436, %v435
      %v482 = vpack.c.b16 %v438, %v437
      %v483 = vpack.c.b16 %v440, %v439
      %v484 = vpack.c.b16 %v442, %v441
      %v485 = vpack.c.b16 %v444, %v443
      %v486 = vpack.c.b16 %v446, %v445
      %v487 = vpack.c.b16 %v448, %v447
      %v488 = vpack.c.b16 %v450, %v449
      %v489 = vpack.c.b16 %v452, %v451
      %v490 = vpack.c.b16 %v454, %v453
      %v491 = vpack.c.b16 %v456, %v455
      %v492 = vpack.c.b16 %v458, %v457
      %v493 = vpack.c.b16 %v460, %v459
      %v494 = vpack.c.b16 %v462, %v461
      %v499 = vunpack.c.l.b16 %v331
      %v500 = vunpack.c.l.b16 %v332
      %v501 = vunpack.c.l.b16 %v333
      %v502 = vunpack.c.l.b16 %v334
      %v503 = vpack.c.b16 %v500, %v499
      %v504 = vpack.c.b16 %v502, %v501
      %vm506 = vcmask 220160
      %v508 = vsel %vm506, %v463, 0
      %v511 = vsel %vm506, %v464, 0
      %v514 = vsel %vm506, %v465, 0
      %v517 = vsel %vm506, %v466, 0
      %v520 = vsel %vm506, %v467, 0
      %v523 = vsel %vm506, %v468, 0
      %v526 = vsel %vm506, %v469, 0
      %v529 = vsel %vm506, %v470, 0
      %v532 = vsel %vm506, %v471, 0
      %v535 = vsel %vm506, %v472, 0
      %v538 = vsel %vm506, %v473, 0
      %v541 = vsel %vm506, %v474, 0
      %v544 = vsel %vm506, %v475, 0
      %v547 = vsel %vm506, %v476, 0
      %v550 = vsel %vm506, %v477, 0
      %v553 = vsel %vm506, %v478, 0
      %v556 = vsel %vm506, %v479, 0
      %v559 = vsel %vm506, %v480, 0
      %v562 = vsel %vm506, %v481, 0
      %v565 = vsel %vm506, %v482, 0
      %v568 = vsel %vm506, %v483, 0
      %v571 = vsel %vm506, %v484, 0
      %v574 = vsel %vm506, %v485, 0
      %v577 = vsel %vm506, %v486, 0
      %v580 = vsel %vm506, %v487, 0
      %v583 = vsel %vm506, %v488, 0
      %v586 = vsel %vm506, %v489, 0
      %v589 = vsel %vm506, %v490, 0
      %v592 = vsel %vm506, %v491, 0
      %v595 = vsel %vm506, %v492, 0
      %v598 = vsel %vm506, %v493, 0
      %v601 = vsel %vm506, %v494, 0
      %vm603 = vcmask 1044480
      %vm604 = vcmask 1045504
      %v605 = vsel %vm603, 4294967295, 65535
      %v606 = vsel %vm604, %v605, 0
      %v608 = vand.u32 %v504, %v606
      %610 = vmatprep.subr.bf16.mxu0 0
      %611 = vmatpush1.bf16.msra.mxu0 %v503
      %612 = vmatprep.subr.bf16.mxu0 0
      %613 = vmatpush1.bf16.msra.mxu0 %v608
      %614 = vmatprep.subr.bf16.mxu0 0
      %615 = vmatpush1.bf16.msra.mxu0 0
      %616 = vmatprep.subr.bf16.mxu0 0
      %617 = vmatpush1.bf16.msra.mxu0 0
      %618 = vmatprep.subr.bf16.mxu0 0
      %619 = vmatpush1.bf16.msra.mxu0 0
      %620 = vmatprep.subr.bf16.mxu0 0
      %621 = vmatpush1.bf16.msra.mxu0 0
      %622 = vmatprep.subr.bf16.mxu0 0
      %623 = vmatpush1.bf16.msra.mxu0 0
      %624 = vmatprep.subr.bf16.mxu0 0
      %625 = vmatpush1.bf16.msra.mxu0 0
      %626 = vmatprep.subr.bf16.mxu0 0
      %627 = vmatpush1.bf16.msra.mxu0 0
      %628 = vmatprep.subr.bf16.mxu0 0
      %629 = vmatpush1.bf16.msra.mxu0 0
      %630 = vmatprep.subr.bf16.mxu0 0
      %631 = vmatpush1.bf16.msra.mxu0 0
      %632 = vmatprep.subr.bf16.mxu0 0
      %633 = vmatpush1.bf16.msra.mxu0 0
      %634 = vmatprep.subr.bf16.mxu0 0
      %635 = vmatpush1.bf16.msra.mxu0 0
      %636 = vmatprep.subr.bf16.mxu0 0
      %637 = vmatpush1.bf16.msra.mxu0 0
      %638 = vmatprep.subr.bf16.mxu0 0
      %639 = vmatpush1.bf16.msra.mxu0 0
      %640 = vmatprep.subr.bf16.mxu0 0
      %641 = vmatpush1.bf16.msra.mxu0 0
      %642 = vmatprep.mubr.bf16.mxu0 0
      %643 = vmatmul.mubr.bf16.gmra.mrb[0].mxu0 %v508
      %v644 = vpop.f32.mrb[0].mxu0
      %v645 = vadd.f32 0.0, %v644
      %v646 = vpop.f32.mrb[0].mxu0
      %v647 = vpop.f32.mrb[0].mxu0
      %v648 = vadd.f32 0.0, %v647
      %v649 = vpop.f32.mrb[0].mxu0
      %650 = vmatprep.mubr.bf16.mxu0 0
      %651 = vmatmul.mubr.bf16.gmra.mrb[0].mxu0 %v511
      %v652 = vpop.f32.mrb[0].mxu0
      %v653 = vadd.f32 0.0, %v652
      %v654 = vpop.f32.mrb[0].mxu0
      %v655 = vpop.f32.mrb[0].mxu0
      %v656 = vadd.f32 0.0, %v655
      %v657 = vpop.f32.mrb[0].mxu0
      %658 = vmatprep.mubr.bf16.mxu0 0
      %659 = vmatmul.mubr.bf16.gmra.mrb[0].mxu0 %v514
      %v660 = vpop.f32.mrb[0].mxu0
      %v661 = vadd.f32 0.0, %v660
      %v662 = vpop.f32.mrb[0].mxu0
      %v663 = vpop.f32.mrb[0].mxu0
      %v664 = vadd.f32 0.0, %v663
      %v665 = vpop.f32.mrb[0].mxu0
      %666 = vmatprep.mubr.bf16.mxu0 0
      %667 = vmatmul.mubr.bf16.gmra.mrb[0].mxu0 %v517
      %v668 = vpop.f32.mrb[0].mxu0
      %v669 = vadd.f32 0.0, %v668
      %v670 = vpop.f32.mrb[0].mxu0
      %v671 = vpop.f32.mrb[0].mxu0
      %v672 = vadd.f32 0.0, %v671
      %v673 = vpop.f32.mrb[0].mxu0
      %674 = vmatprep.mubr.bf16.mxu0 0
      %675 = vmatmul.mubr.bf16.gmra.mrb[0].mxu0 %v520
      %v676 = vpop.f32.mrb[0].mxu0
      %v677 = vadd.f32 0.0, %v676
      %v678 = vpop.f32.mrb[0].mxu0
      %v679 = vpop.f32.mrb[0].mxu0
      %v680 = vadd.f32 0.0, %v679
      %v681 = vpop.f32.mrb[0].mxu0
      %682 = vmatprep.mubr.bf16.mxu0 0
      %683 = vmatmul.mubr.bf16.gmra.mrb[0].mxu0 %v523
      %v684 = vpop.f32.mrb[0].mxu0
      %v685 = vadd.f32 0.0, %v684
      %v686 = vpop.f32.mrb[0].mxu0
      %v687 = vpop.f32.mrb[0].mxu0
      %v688 = vadd.f32 0.0, %v687
      %v689 = vpop.f32.mrb[0].mxu0
      %690 = vmatprep.mubr.bf16.mxu0 0
      %691 = vmatmul.mubr.bf16.gmra.mrb[0].mxu0 %v526
      %v692 = vpop.f32.mrb[0].mxu0
      %v693 = vadd.f32 0.0, %v692
      %v694 = vpop.f32.mrb[0].mxu0
      %v695 = vpop.f32.mrb[0].mxu0
      %v696 = vadd.f32 0.0, %v695
      %v697 = vpop.f32.mrb[0].mxu0
      %698 = vmatprep.mubr.bf16.mxu0 0
      %699 = vmatmul.mubr.bf16.gmra.mrb[0].mxu0 %v529
      %v700 = vpop.f32.mrb[0].mxu0
      %v701 = vadd.f32 0.0, %v700
      %v702 = vpop.f32.mrb[0].mxu0
      %v703 = vpop.f32.mrb[0].mxu0
      %v704 = vadd.f32 0.0, %v703
      %v705 = vpop.f32.mrb[0].mxu0
      %706 = vmatprep.mubr.bf16.mxu0 0
      %707 = vmatmul.mubr.bf16.gmra.mrb[0].mxu0 %v532
      %v708 = vpop.f32.mrb[0].mxu0
      %v709 = vadd.f32 0.0, %v708
      %v710 = vpop.f32.mrb[0].mxu0
      %v711 = vpop.f32.mrb[0].mxu0
      %v712 = vadd.f32 0.0, %v711
      %v713 = vpop.f32.mrb[0].mxu0
      %714 = vmatprep.mubr.bf16.mxu0 0
      %715 = vmatmul.mubr.bf16.gmra.mrb[0].mxu0 %v535
      %v716 = vpop.f32.mrb[0].mxu0
      %v717 = vadd.f32 0.0, %v716
      %v718 = vpop.f32.mrb[0].mxu0
      %v719 = vpop.f32.mrb[0].mxu0
      %v720 = vadd.f32 0.0, %v719
      %v721 = vpop.f32.mrb[0].mxu0
      %722 = vmatprep.mubr.bf16.mxu0 0
      %723 = vmatmul.mubr.bf16.gmra.mrb[0].mxu0 %v538
      %v724 = vpop.f32.mrb[0].mxu0
      %v725 = vadd.f32 0.0, %v724
      %v726 = vpop.f32.mrb[0].mxu0
      %v727 = vpop.f32.mrb[0].mxu0
      %v728 = vadd.f32 0.0, %v727
      %v729 = vpop.f32.mrb[0].mxu0
      %730 = vmatprep.mubr.bf16.mxu0 0
      %731 = vmatmul.mubr.bf16.gmra.mrb[0].mxu0 %v541
      %v732 = vpop.f32.mrb[0].mxu0
      %v733 = vadd.f32 0.0, %v732
      %v734 = vpop.f32.mrb[0].mxu0
      %v735 = vpop.f32.mrb[0].mxu0
      %v736 = vadd.f32 0.0, %v735
      %v737 = vpop.f32.mrb[0].mxu0
      %738 = vmatprep.mubr.bf16.mxu0 0
      %739 = vmatmul.mubr.bf16.gmra.mrb[0].mxu0 %v544
      %v740 = vpop.f32.mrb[0].mxu0
      %v741 = vadd.f32 0.0, %v740
      %v742 = vpop.f32.mrb[0].mxu0
      %v743 = vpop.f32.mrb[0].mxu0
      %v744 = vadd.f32 0.0, %v743
      %v745 = vpop.f32.mrb[0].mxu0
      %746 = vmatprep.mubr.bf16.mxu0 0
      %747 = vmatmul.mubr.bf16.gmra.mrb[0].mxu0 %v547
      %v748 = vpop.f32.mrb[0].mxu0
      %v749 = vadd.f32 0.0, %v748
      %v750 = vpop.f32.mrb[0].mxu0
      %v751 = vpop.f32.mrb[0].mxu0
      %v752 = vadd.f32 0.0, %v751
      %v753 = vpop.f32.mrb[0].mxu0
      %754 = vmatprep.mubr.bf16.mxu0 0
      %755 = vmatmul.mubr.bf16.gmra.mrb[0].mxu0 %v550
      %v756 = vpop.f32.mrb[0].mxu0
      %v757 = vadd.f32 0.0, %v756
      %v758 = vpop.f32.mrb[0].mxu0
      %v759 = vpop.f32.mrb[0].mxu0
      %v760 = vadd.f32 0.0, %v759
      %v761 = vpop.f32.mrb[0].mxu0
      %762 = vmatprep.mubr.bf16.mxu0 0
      %763 = vmatmul.mubr.bf16.gmra.mrb[0].mxu0 %v553
      %v764 = vpop.f32.mrb[0].mxu0
      %v765 = vadd.f32 0.0, %v764
      %v766 = vpop.f32.mrb[0].mxu0
      %v767 = vpop.f32.mrb[0].mxu0
      %v768 = vadd.f32 0.0, %v767
      %v769 = vpop.f32.mrb[0].mxu0
      %770 = vmatprep.mubr.bf16.mxu0 0
      %771 = vmatmul.mubr.bf16.gmra.mrb[0].mxu0 %v556
      %v772 = vpop.f32.mrb[0].mxu0
      %v773 = vadd.f32 0.0, %v772
      %v774 = vpop.f32.mrb[0].mxu0
      %v775 = vpop.f32.mrb[0].mxu0
      %v776 = vadd.f32 0.0, %v775
      %v777 = vpop.f32.mrb[0].mxu0
      %778 = vmatprep.mubr.bf16.mxu0 0
      %779 = vmatmul.mubr.bf16.gmra.mrb[0].mxu0 %v559
      %v780 = vpop.f32.mrb[0].mxu0
      %v781 = vadd.f32 0.0, %v780
      %v782 = vpop.f32.mrb[0].mxu0
      %v783 = vpop.f32.mrb[0].mxu0
      %v784 = vadd.f32 0.0, %v783
      %v785 = vpop.f32.mrb[0].mxu0
      %786 = vmatprep.mubr.bf16.mxu0 0
      %787 = vmatmul.mubr.bf16.gmra.mrb[0].mxu0 %v562
      %v788 = vpop.f32.mrb[0].mxu0
      %v789 = vadd.f32 0.0, %v788
      %v790 = vpop.f32.mrb[0].mxu0
      %v791 = vpop.f32.mrb[0].mxu0
      %v792 = vadd.f32 0.0, %v791
      %v793 = vpop.f32.mrb[0].mxu0
      %794 = vmatprep.mubr.bf16.mxu0 0
      %795 = vmatmul.mubr.bf16.gmra.mrb[0].mxu0 %v565
      %v796 = vpop.f32.mrb[0].mxu0
      %v797 = vadd.f32 0.0, %v796
      %v798 = vpop.f32.mrb[0].mxu0
      %v799 = vpop.f32.mrb[0].mxu0
      %v800 = vadd.f32 0.0, %v799
      %v801 = vpop.f32.mrb[0].mxu0
      %802 = vmatprep.mubr.bf16.mxu0 0
      %803 = vmatmul.mubr.bf16.gmra.mrb[0].mxu0 %v568
      %v804 = vpop.f32.mrb[0].mxu0
      %v805 = vadd.f32 0.0, %v804
      %v806 = vpop.f32.mrb[0].mxu0
      %v807 = vpop.f32.mrb[0].mxu0
      %v808 = vadd.f32 0.0, %v807
      %v809 = vpop.f32.mrb[0].mxu0
      %810 = vmatprep.mubr.bf16.mxu0 0
      %811 = vmatmul.mubr.bf16.gmra.mrb[0].mxu0 %v571
      %v812 = vpop.f32.mrb[0].mxu0
      %v813 = vadd.f32 0.0, %v812
      %v814 = vpop.f32.mrb[0].mxu0
      %v815 = vpop.f32.mrb[0].mxu0
      %v816 = vadd.f32 0.0, %v815
      %v817 = vpop.f32.mrb[0].mxu0
      %818 = vmatprep.mubr.bf16.mxu0 0
      %819 = vmatmul.mubr.bf16.gmra.mrb[0].mxu0 %v574
      %v820 = vpop.f32.mrb[0].mxu0
      %v821 = vadd.f32 0.0, %v820
      %v822 = vpop.f32.mrb[0].mxu0
      %v823 = vpop.f32.mrb[0].mxu0
      %v824 = vadd.f32 0.0, %v823
      %v825 = vpop.f32.mrb[0].mxu0
      %826 = vmatprep.mubr.bf16.mxu0 0
      %827 = vmatmul.mubr.bf16.gmra.mrb[0].mxu0 %v577
      %v828 = vpop.f32.mrb[0].mxu0
      %v829 = vadd.f32 0.0, %v828
      %v830 = vpop.f32.mrb[0].mxu0
      %v831 = vpop.f32.mrb[0].mxu0
      %v832 = vadd.f32 0.0, %v831
      %v833 = vpop.f32.mrb[0].mxu0
      %834 = vmatprep.mubr.bf16.mxu0 0
      %835 = vmatmul.mubr.bf16.gmra.mrb[0].mxu0 %v580
      %v836 = vpop.f32.mrb[0].mxu0
      %v837 = vadd.f32 0.0, %v836
      %v838 = vpop.f32.mrb[0].mxu0
      %v839 = vpop.f32.mrb[0].mxu0
      %v840 = vadd.f32 0.0, %v839
      %v841 = vpop.f32.mrb[0].mxu0
      %842 = vmatprep.mubr.bf16.mxu0 0
      %843 = vmatmul.mubr.bf16.gmra.mrb[0].mxu0 %v583
      %v844 = vpop.f32.mrb[0].mxu0
      %v845 = vadd.f32 0.0, %v844
      %v846 = vpop.f32.mrb[0].mxu0
      %v847 = vpop.f32.mrb[0].mxu0
      %v848 = vadd.f32 0.0, %v847
      %v849 = vpop.f32.mrb[0].mxu0
      %850 = vmatprep.mubr.bf16.mxu0 0
      %851 = vmatmul.mubr.bf16.gmra.mrb[0].mxu0 %v586
      %v852 = vpop.f32.mrb[0].mxu0
      %v853 = vadd.f32 0.0, %v852
      %v854 = vpop.f32.mrb[0].mxu0
      %v855 = vpop.f32.mrb[0].mxu0
      %v856 = vadd.f32 0.0, %v855
      %v857 = vpop.f32.mrb[0].mxu0
      %858 = vmatprep.mubr.bf16.mxu0 0
      %859 = vmatmul.mubr.bf16.gmra.mrb[0].mxu0 %v589
      %v860 = vpop.f32.mrb[0].mxu0
      %v861 = vadd.f32 0.0, %v860
      %v862 = vpop.f32.mrb[0].mxu0
      %v863 = vpop.f32.mrb[0].mxu0
      %v864 = vadd.f32 0.0, %v863
      %v865 = vpop.f32.mrb[0].mxu0
      %866 = vmatprep.mubr.bf16.mxu0 0
      %867 = vmatmul.mubr.bf16.gmra.mrb[0].mxu0 %v592
      %v868 = vpop.f32.mrb[0].mxu0
      %v869 = vadd.f32 0.0, %v868
      %v870 = vpop.f32.mrb[0].mxu0
      %v871 = vpop.f32.mrb[0].mxu0
      %v872 = vadd.f32 0.0, %v871
      %v873 = vpop.f32.mrb[0].mxu0
      %874 = vmatprep.mubr.bf16.mxu0 0
      %875 = vmatmul.mubr.bf16.gmra.mrb[0].mxu0 %v595
      %v876 = vpop.f32.mrb[0].mxu0
      %v877 = vadd.f32 0.0, %v876
      %v878 = vpop.f32.mrb[0].mxu0
      %v879 = vpop.f32.mrb[0].mxu0
      %v880 = vadd.f32 0.0, %v879
      %v881 = vpop.f32.mrb[0].mxu0
      %882 = vmatprep.mubr.bf16.mxu0 0
      %883 = vmatmul.mubr.bf16.gmra.mrb[0].mxu0 %v598
      %v884 = vpop.f32.mrb[0].mxu0
      %v885 = vadd.f32 0.0, %v884
      %v886 = vpop.f32.mrb[0].mxu0
      %v887 = vpop.f32.mrb[0].mxu0
      %v888 = vadd.f32 0.0, %v887
      %v889 = vpop.f32.mrb[0].mxu0
      %890 = vmatprep.mubr.bf16.mxu0 0
      %891 = vmatmul.mubr.bf16.gmra.mrb[0].mxu0 %v601
      %v892 = vpop.f32.mrb[0].mxu0
      %v893 = vadd.f32 0.0, %v892
      %v894 = vpop.f32.mrb[0].mxu0
      %v895 = vpop.f32.mrb[0].mxu0
      %v896 = vadd.f32 0.0, %v895
      %v897 = vpop.f32.mrb[0].mxu0
      %898 = vdwg.mxu0
      %v899 = vld [vmem:[%s253] sm:$0x1]
      %v901 = vlaneseq
      %v902 = vshrl.u32 %v901, 7
      %v903 = vsub.s32 0, %v902
      %v904 = vrot.slane %v899, %v903
      %v906 = vmul.f32 %v645, %v904
      %v907 = vmul.f32 %v648, %v904
      %v908 = vmul.f32 %v653, %v904
      %v909 = vmul.f32 %v656, %v904
      %v910 = vmul.f32 %v661, %v904
      %v911 = vmul.f32 %v664, %v904
      %v912 = vmul.f32 %v669, %v904
      %v913 = vmul.f32 %v672, %v904
      %v914 = vmul.f32 %v677, %v904
      %v915 = vmul.f32 %v680, %v904
      %v916 = vmul.f32 %v685, %v904
      %v917 = vmul.f32 %v688, %v904
      %v918 = vmul.f32 %v693, %v904
      %v919 = vmul.f32 %v696, %v904
      %v920 = vmul.f32 %v701, %v904
      %v921 = vmul.f32 %v704, %v904
      %v922 = vmul.f32 %v709, %v904
      %v923 = vmul.f32 %v712, %v904
      %v924 = vmul.f32 %v717, %v904
      %v925 = vmul.f32 %v720, %v904
      %v926 = vmul.f32 %v725, %v904
      %v927 = vmul.f32 %v728, %v904
      %v928 = vmul.f32 %v733, %v904
      %v929 = vmul.f32 %v736, %v904
      %v930 = vmul.f32 %v741, %v904
      %v931 = vmul.f32 %v744, %v904
      %v932 = vmul.f32 %v749, %v904
      %v933 = vmul.f32 %v752, %v904
      %v934 = vmul.f32 %v757, %v904
      %v935 = vmul.f32 %v760, %v904
      %v936 = vmul.f32 %v765, %v904
      %v937 = vmul.f32 %v768, %v904
      %v938 = vmul.f32 %v773, %v904
      %v939 = vmul.f32 %v776, %v904
      %v940 = vmul.f32 %v781, %v904
      %v941 = vmul.f32 %v784, %v904
      %v942 = vmul.f32 %v789, %v904
      %v943 = vmul.f32 %v792, %v904
      %v944 = vmul.f32 %v797, %v904
      %v945 = vmul.f32 %v800, %v904
      %v946 = vmul.f32 %v805, %v904
      %v947 = vmul.f32 %v808, %v904
      %v948 = vmul.f32 %v813, %v904
      %v949 = vmul.f32 %v816, %v904
      %v950 = vmul.f32 %v821, %v904
      %v951 = vmul.f32 %v824, %v904
      %v952 = vmul.f32 %v829, %v904
      %v953 = vmul.f32 %v832, %v904
      %v954 = vmul.f32 %v837, %v904
      %v955 = vmul.f32 %v840, %v904
      %v956 = vmul.f32 %v845, %v904
      %v957 = vmul.f32 %v848, %v904
      %v958 = vmul.f32 %v853, %v904
      %v959 = vmul.f32 %v856, %v904
      %v960 = vmul.f32 %v861, %v904
      %v961 = vmul.f32 %v864, %v904
      %v962 = vmul.f32 %v869, %v904
      %v963 = vmul.f32 %v872, %v904
      %v964 = vmul.f32 %v877, %v904
      %v965 = vmul.f32 %v880, %v904
      %v966 = vmul.f32 %v885, %v904
      %v967 = vmul.f32 %v888, %v904
      %v968 = vmul.f32 %v893, %v904
      %v969 = vmul.f32 %v896, %v904
      %v970 = vld [vmem:[%s256] sm:$0x1]
      %v972 = vlaneseq
      %v973 = vshrl.u32 %v972, 7
      %v974 = vsub.s32 0, %v973
      %v975 = vrot.slane %v970, %v974
      %v977 = vadd.f32 %v906, %v975
      %v978 = vadd.f32 %v907, %v975
      %v979 = vadd.f32 %v908, %v975
      %v980 = vadd.f32 %v909, %v975
      %v981 = vadd.f32 %v910, %v975
      %v982 = vadd.f32 %v911, %v975
      %v983 = vadd.f32 %v912, %v975
      %v984 = vadd.f32 %v913, %v975
      %v985 = vadd.f32 %v914, %v975
      %v986 = vadd.f32 %v915, %v975
      %v987 = vadd.f32 %v916, %v975
      %v988 = vadd.f32 %v917, %v975
      %v989 = vadd.f32 %v918, %v975
      %v990 = vadd.f32 %v919, %v975
      %v991 = vadd.f32 %v920, %v975
      %v992 = vadd.f32 %v921, %v975
      %v993 = vadd.f32 %v922, %v975
      %v994 = vadd.f32 %v923, %v975
      %v995 = vadd.f32 %v924, %v975
      %v996 = vadd.f32 %v925, %v975
      %v997 = vadd.f32 %v926, %v975
      %v998 = vadd.f32 %v927, %v975
      %v999 = vadd.f32 %v928, %v975
      %v1000 = vadd.f32 %v929, %v975
      %v1001 = vadd.f32 %v930, %v975
      %v1002 = vadd.f32 %v931, %v975
      %v1003 = vadd.f32 %v932, %v975
      %v1004 = vadd.f32 %v933, %v975
      %v1005 = vadd.f32 %v934, %v975
      %v1006 = vadd.f32 %v935, %v975
      %v1007 = vadd.f32 %v936, %v975
      %v1008 = vadd.f32 %v937, %v975
      %v1009 = vadd.f32 %v938, %v975
      %v1010 = vadd.f32 %v939, %v975
      %v1011 = vadd.f32 %v940, %v975
      %v1012 = vadd.f32 %v941, %v975
      %v1013 = vadd.f32 %v942, %v975
      %v1014 = vadd.f32 %v943, %v975
      %v1015 = vadd.f32 %v944, %v975
      %v1016 = vadd.f32 %v945, %v975
      %v1017 = vadd.f32 %v946, %v975
      %v1018 = vadd.f32 %v947, %v975
      %v1019 = vadd.f32 %v948, %v975
      %v1020 = vadd.f32 %v949, %v975
      %v1021 = vadd.f32 %v950, %v975
      %v1022 = vadd.f32 %v951, %v975
      %v1023 = vadd.f32 %v952, %v975
      %v1024 = vadd.f32 %v953, %v975
      %v1025 = vadd.f32 %v954, %v975
      %v1026 = vadd.f32 %v955, %v975
      %v1027 = vadd.f32 %v956, %v975
      %v1028 = vadd.f32 %v957, %v975
      %v1029 = vadd.f32 %v958, %v975
      %v1030 = vadd.f32 %v959, %v975
      %v1031 = vadd.f32 %v960, %v975
      %v1032 = vadd.f32 %v961, %v975
      %v1033 = vadd.f32 %v962, %v975
      %v1034 = vadd.f32 %v963, %v975
      %v1035 = vadd.f32 %v964, %v975
      %v1036 = vadd.f32 %v965, %v975
      %v1037 = vadd.f32 %v966, %v975
      %v1038 = vadd.f32 %v967, %v975
      %v1039 = vadd.f32 %v968, %v975
      %v1040 = vadd.f32 %v969, %v975
      %v1041 = vmax.f32 %v977, 0.0
      %v1042 = vmax.f32 %v978, 0.0
      %v1043 = vmax.f32 %v979, 0.0
      %v1044 = vmax.f32 %v980, 0.0
      %v1045 = vmax.f32 %v981, 0.0
      %v1046 = vmax.f32 %v982, 0.0
      %v1047 = vmax.f32 %v983, 0.0
      %v1048 = vmax.f32 %v984, 0.0
      %v1049 = vmax.f32 %v985, 0.0
      %v1050 = vmax.f32 %v986, 0.0
      %v1051 = vmax.f32 %v987, 0.0
      %v1052 = vmax.f32 %v988, 0.0
      %v1053 = vmax.f32 %v989, 0.0
      %v1054 = vmax.f32 %v990, 0.0
      %v1055 = vmax.f32 %v991, 0.0
      %v1056 = vmax.f32 %v992, 0.0
      %v1057 = vmax.f32 %v993, 0.0
      %v1058 = vmax.f32 %v994, 0.0
      %v1059 = vmax.f32 %v995, 0.0
      %v1060 = vmax.f32 %v996, 0.0
      %v1061 = vmax.f32 %v997, 0.0
      %v1062 = vmax.f32 %v998, 0.0
      %v1063 = vmax.f32 %v999, 0.0
      %v1064 = vmax.f32 %v1000, 0.0
      %v1065 = vmax.f32 %v1001, 0.0
      %v1066 = vmax.f32 %v1002, 0.0
      %v1067 = vmax.f32 %v1003, 0.0
      %v1068 = vmax.f32 %v1004, 0.0
      %v1069 = vmax.f32 %v1005, 0.0
      %v1070 = vmax.f32 %v1006, 0.0
      %v1071 = vmax.f32 %v1007, 0.0
      %v1072 = vmax.f32 %v1008, 0.0
      %v1073 = vmax.f32 %v1009, 0.0
      %v1074 = vmax.f32 %v1010, 0.0
      %v1075 = vmax.f32 %v1011, 0.0
      %v1076 = vmax.f32 %v1012, 0.0
      %v1077 = vmax.f32 %v1013, 0.0
      %v1078 = vmax.f32 %v1014, 0.0
      %v1079 = vmax.f32 %v1015, 0.0
      %v1080 = vmax.f32 %v1016, 0.0
      %v1081 = vmax.f32 %v1017, 0.0
      %v1082 = vmax.f32 %v1018, 0.0
      %v1083 = vmax.f32 %v1019, 0.0
      %v1084 = vmax.f32 %v1020, 0.0
      %v1085 = vmax.f32 %v1021, 0.0
      %v1086 = vmax.f32 %v1022, 0.0
      %v1087 = vmax.f32 %v1023, 0.0
      %v1088 = vmax.f32 %v1024, 0.0
      %v1089 = vmax.f32 %v1025, 0.0
      %v1090 = vmax.f32 %v1026, 0.0
      %v1091 = vmax.f32 %v1027, 0.0
      %v1092 = vmax.f32 %v1028, 0.0
      %v1093 = vmax.f32 %v1029, 0.0
      %v1094 = vmax.f32 %v1030, 0.0
      %v1095 = vmax.f32 %v1031, 0.0
      %v1096 = vmax.f32 %v1032, 0.0
      %v1097 = vmax.f32 %v1033, 0.0
      %v1098 = vmax.f32 %v1034, 0.0
      %v1099 = vmax.f32 %v1035, 0.0
      %v1100 = vmax.f32 %v1036, 0.0
      %v1101 = vmax.f32 %v1037, 0.0
      %v1102 = vmax.f32 %v1038, 0.0
      %v1103 = vmax.f32 %v1039, 0.0
      %v1104 = vmax.f32 %v1040, 0.0
      %v1105 = vpack.c.bf16 %v1042, %v1041
      %v1106 = vpack.c.bf16 %v1044, %v1043
      %v1107 = vpack.c.bf16 %v1046, %v1045
      %v1108 = vpack.c.bf16 %v1048, %v1047
      %v1109 = vpack.c.bf16 %v1050, %v1049
      %v1110 = vpack.c.bf16 %v1052, %v1051
      %v1111 = vpack.c.bf16 %v1054, %v1053
      %v1112 = vpack.c.bf16 %v1056, %v1055
      %v1113 = vpack.c.bf16 %v1058, %v1057
      %v1114 = vpack.c.bf16 %v1060, %v1059
      %v1115 = vpack.c.bf16 %v1062, %v1061
      %v1116 = vpack.c.bf16 %v1064, %v1063
      %v1117 = vpack.c.bf16 %v1066, %v1065
      %v1118 = vpack.c.bf16 %v1068, %v1067
      %v1119 = vpack.c.bf16 %v1070, %v1069
      %v1120 = vpack.c.bf16 %v1072, %v1071
      %v1121 = vpack.c.bf16 %v1074, %v1073
      %v1122 = vpack.c.bf16 %v1076, %v1075
      %v1123 = vpack.c.bf16 %v1078, %v1077
      %v1124 = vpack.c.bf16 %v1080, %v1079
      %v1125 = vpack.c.bf16 %v1082, %v1081
      %v1126 = vpack.c.bf16 %v1084, %v1083
      %v1127 = vpack.c.bf16 %v1086, %v1085
      %v1128 = vpack.c.bf16 %v1088, %v1087
      %v1129 = vpack.c.bf16 %v1090, %v1089
      %v1130 = vpack.c.bf16 %v1092, %v1091
      %v1131 = vpack.c.bf16 %v1094, %v1093
      %v1132 = vpack.c.bf16 %v1096, %v1095
      %v1133 = vpack.c.bf16 %v1098, %v1097
      %v1134 = vpack.c.bf16 %v1100, %v1099
      %v1135 = vpack.c.bf16 %v1102, %v1101
      %v1136 = vpack.c.bf16 %v1104, %v1103
      %v1169 = vunpack.c.l.b16 %v1105
      %v1170 = vunpack.c.h.b16 %v1105
      %v1171 = vunpack.c.l.b16 %v1106
      %v1172 = vunpack.c.h.b16 %v1106
      %v1173 = vunpack.c.l.b16 %v1107
      %v1174 = vunpack.c.h.b16 %v1107
      %v1175 = vunpack.c.l.b16 %v1108
      %v1176 = vunpack.c.h.b16 %v1108
      %v1177 = vunpack.c.l.b16 %v1109
      %v1178 = vunpack.c.h.b16 %v1109
      %v1179 = vunpack.c.l.b16 %v1110
      %v1180 = vunpack.c.h.b16 %v1110
      %v1181 = vunpack.c.l.b16 %v1111
      %v1182 = vunpack.c.h.b16 %v1111
      %v1183 = vunpack.c.l.b16 %v1112
      %v1184 = vunpack.c.h.b16 %v1112
      %v1185 = vunpack.c.l.b16 %v1113
      %v1186 = vunpack.c.h.b16 %v1113
      %v1187 = vunpack.c.l.b16 %v1114
      %v1188 = vunpack.c.h.b16 %v1114
      %v1189 = vunpack.c.l.b16 %v1115
      %v1190 = vunpack.c.h.b16 %v1115
      %v1191 = vunpack.c.l.b16 %v1116
      %v1192 = vunpack.c.h.b16 %v1116
      %v1193 = vunpack.c.l.b16 %v1117
      %v1194 = vunpack.c.h.b16 %v1117
      %v1195 = vunpack.c.l.b16 %v1118
      %v1196 = vunpack.c.h.b16 %v1118
      %v1197 = vunpack.c.l.b16 %v1119
      %v1198 = vunpack.c.h.b16 %v1119
      %v1199 = vunpack.c.l.b16 %v1120
      %v1200 = vunpack.c.h.b16 %v1120
      %v1201 = vunpack.c.l.b16 %v1121
      %v1202 = vunpack.c.h.b16 %v1121
      %v1203 = vunpack.c.l.b16 %v1122
      %v1204 = vunpack.c.h.b16 %v1122
      %v1205 = vunpack.c.l.b16 %v1123
      %v1206 = vunpack.c.h.b16 %v1123
      %v1207 = vunpack.c.l.b16 %v1124
      %v1208 = vunpack.c.h.b16 %v1124
      %v1209 = vunpack.c.l.b16 %v1125
      %v1210 = vunpack.c.h.b16 %v1125
      %v1211 = vunpack.c.l.b16 %v1126
      %v1212 = vunpack.c.h.b16 %v1126
      %v1213 = vunpack.c.l.b16 %v1127
      %v1214 = vunpack.c.h.b16 %v1127
      %v1215 = vunpack.c.l.b16 %v1128
      %v1216 = vunpack.c.h.b16 %v1128
      %v1217 = vunpack.c.l.b16 %v1129
      %v1218 = vunpack.c.h.b16 %v1129
      %v1219 = vunpack.c.l.b16 %v1130
      %v1220 = vunpack.c.h.b16 %v1130
      %v1221 = vunpack.c.l.b16 %v1131
      %v1222 = vunpack.c.h.b16 %v1131
      %v1223 = vunpack.c.l.b16 %v1132
      %v1224 = vunpack.c.h.b16 %v1132
      %v1225 = vunpack.c.l.b16 %v1133
      %v1226 = vunpack.c.h.b16 %v1133
      %v1227 = vunpack.c.l.b16 %v1134
      %v1228 = vunpack.c.h.b16 %v1134
      %v1229 = vunpack.c.l.b16 %v1135
      %v1230 = vunpack.c.h.b16 %v1135
      %v1231 = vunpack.c.l.b16 %v1136
      %v1232 = vunpack.c.h.b16 %v1136
      %v1233 = vpack.c.b16 %v1169, %v1169
      %v1234 = vpack.c.b16 %v1170, %v1170
      %v1235 = vpack.c.b16 %v1171, %v1171
      %v1236 = vpack.c.b16 %v1172, %v1172
      %v1237 = vpack.c.b16 %v1173, %v1173
      %v1238 = vpack.c.b16 %v1174, %v1174
      %v1239 = vpack.c.b16 %v1175, %v1175
      %v1240 = vpack.c.b16 %v1176, %v1176
      %v1241 = vpack.c.b16 %v1177, %v1177
      %v1242 = vpack.c.b16 %v1178, %v1178
      %v1243 = vpack.c.b16 %v1179, %v1179
      %v1244 = vpack.c.b16 %v1180, %v1180
      %v1245 = vpack.c.b16 %v1181, %v1181
      %v1246 = vpack.c.b16 %v1182, %v1182
      %v1247 = vpack.c.b16 %v1183, %v1183
      %v1248 = vpack.c.b16 %v1184, %v1184
      %v1249 = vpack.c.b16 %v1185, %v1185
      %v1250 = vpack.c.b16 %v1186, %v1186
      %v1251 = vpack.c.b16 %v1187, %v1187
      %v1252 = vpack.c.b16 %v1188, %v1188
      %v1253 = vpack.c.b16 %v1189, %v1189
      %v1254 = vpack.c.b16 %v1190, %v1190
      %v1255 = vpack.c.b16 %v1191, %v1191
      %v1256 = vpack.c.b16 %v1192, %v1192
      %v1257 = vpack.c.b16 %v1193, %v1193
      %v1258 = vpack.c.b16 %v1194, %v1194
      %v1259 = vpack.c.b16 %v1195, %v1195
      %v1260 = vpack.c.b16 %v1196, %v1196
      %v1261 = vpack.c.b16 %v1197, %v1197
      %v1262 = vpack.c.b16 %v1198, %v1198
      %v1263 = vpack.c.b16 %v1199, %v1199
      %v1264 = vpack.c.b16 %v1200, %v1200
      %v1265 = vpack.c.b16 %v1201, %v1201
      %v1266 = vpack.c.b16 %v1202, %v1202
      %v1267 = vpack.c.b16 %v1203, %v1203
      %v1268 = vpack.c.b16 %v1204, %v1204
      %v1269 = vpack.c.b16 %v1205, %v1205
      %v1270 = vpack.c.b16 %v1206, %v1206
      %v1271 = vpack.c.b16 %v1207, %v1207
      %v1272 = vpack.c.b16 %v1208, %v1208
      %v1273 = vpack.c.b16 %v1209, %v1209
      %v1274 = vpack.c.b16 %v1210, %v1210
      %v1275 = vpack.c.b16 %v1211, %v1211
      %v1276 = vpack.c.b16 %v1212, %v1212
      %v1277 = vpack.c.b16 %v1213, %v1213
      %v1278 = vpack.c.b16 %v1214, %v1214
      %v1279 = vpack.c.b16 %v1215, %v1215
      %v1280 = vpack.c.b16 %v1216, %v1216
      %v1281 = vpack.c.b16 %v1217, %v1217
      %v1282 = vpack.c.b16 %v1218, %v1218
      %v1283 = vpack.c.b16 %v1219, %v1219
      %v1284 = vpack.c.b16 %v1220, %v1220
      %v1285 = vpack.c.b16 %v1221, %v1221
      %v1286 = vpack.c.b16 %v1222, %v1222
      %v1287 = vpack.c.b16 %v1223, %v1223
      %v1288 = vpack.c.b16 %v1224, %v1224
      %v1289 = vpack.c.b16 %v1225, %v1225
      %v1290 = vpack.c.b16 %v1226, %v1226
      %v1291 = vpack.c.b16 %v1227, %v1227
      %v1292 = vpack.c.b16 %v1228, %v1228
      %v1293 = vpack.c.b16 %v1229, %v1229
      %v1294 = vpack.c.b16 %v1230, %v1230
      %v1295 = vpack.c.b16 %v1231, %v1231
      %v1296 = vpack.c.b16 %v1232, %v1232
      %vm1361 = vcmask 519168
      %1362 = vst.msk [vmem:[%s264] sm:$0xf] %vm1361, %v1233
      %1363 = vst.msk [vmem:[%s264 + $0x4] sm:$0xf] %vm1361, %v1234
      %1364 = vst.msk [vmem:[%s264 + $0x8] sm:$0xf] %vm1361, %v1235
      %1365 = vst.msk [vmem:[%s264 + $0xc] sm:$0xf] %vm1361, %v1236
      %1366 = vst.msk [vmem:[%s264 + $0x10] sm:$0xf] %vm1361, %v1237
      %1367 = vst.msk [vmem:[%s264 + $0x14] sm:$0xf] %vm1361, %v1238
      %1368 = vst.msk [vmem:[%s264 + $0x18] sm:$0xf] %vm1361, %v1239
      %1369 = vst.msk [vmem:[%s264 + $0x1c] sm:$0xf] %vm1361, %v1240
      %1370 = vst.msk [vmem:[%s264 + $0x20] sm:$0xf] %vm1361, %v1241
      %1371 = vst.msk [vmem:[%s264 + $0x24] sm:$0xf] %vm1361, %v1242
      %1372 = vst.msk [vmem:[%s264 + $0x28] sm:$0xf] %vm1361, %v1243
      %1373 = vst.msk [vmem:[%s264 + $0x2c] sm:$0xf] %vm1361, %v1244
      %1374 = vst.msk [vmem:[%s264 + $0x30] sm:$0xf] %vm1361, %v1245
      %1375 = vst.msk [vmem:[%s264 + $0x34] sm:$0xf] %vm1361, %v1246
      %1376 = vst.msk [vmem:[%s264 + $0x38] sm:$0xf] %vm1361, %v1247
      %1377 = vst.msk [vmem:[%s264 + $0x3c] sm:$0xf] %vm1361, %v1248
      %1378 = vst.msk [vmem:[%s264 + $0x40] sm:$0xf] %vm1361, %v1249
      %1379 = vst.msk [vmem:[%s264 + $0x44] sm:$0xf] %vm1361, %v1250
      %1380 = vst.msk [vmem:[%s264 + $0x48] sm:$0xf] %vm1361, %v1251
      %1381 = vst.msk [vmem:[%s264 + $0x4c] sm:$0xf] %vm1361, %v1252
      %1382 = vst.msk [vmem:[%s264 + $0x50] sm:$0xf] %vm1361, %v1253
      %1383 = vst.msk [vmem:[%s264 + $0x54] sm:$0xf] %vm1361, %v1254
      %1384 = vst.msk [vmem:[%s264 + $0x58] sm:$0xf] %vm1361, %v1255
      %1385 = vst.msk [vmem:[%s264 + $0x5c] sm:$0xf] %vm1361, %v1256
      %1386 = vst.msk [vmem:[%s264 + $0x60] sm:$0xf] %vm1361, %v1257
      %1387 = vst.msk [vmem:[%s264 + $0x64] sm:$0xf] %vm1361, %v1258
      %1388 = vst.msk [vmem:[%s264 + $0x68] sm:$0xf] %vm1361, %v1259
      %1389 = vst.msk [vmem:[%s264 + $0x6c] sm:$0xf] %vm1361, %v1260
      %1390 = vst.msk [vmem:[%s264 + $0x70] sm:$0xf] %vm1361, %v1261
      %1391 = vst.msk [vmem:[%s264 + $0x74] sm:$0xf] %vm1361, %v1262
      %1392 = vst.msk [vmem:[%s264 + $0x78] sm:$0xf] %vm1361, %v1263
      %1393 = vst.msk [vmem:[%s264 + $0x7c] sm:$0xf] %vm1361, %v1264
      %1394 = vst.msk [vmem:[%s264 + $0x80] sm:$0xf] %vm1361, %v1265
      %1395 = vst.msk [vmem:[%s264 + $0x84] sm:$0xf] %vm1361, %v1266
      %1396 = vst.msk [vmem:[%s264 + $0x88] sm:$0xf] %vm1361, %v1267
      %1397 = vst.msk [vmem:[%s264 + $0x8c] sm:$0xf] %vm1361, %v1268
      %1398 = vst.msk [vmem:[%s264 + $0x90] sm:$0xf] %vm1361, %v1269
      %1399 = vst.msk [vmem:[%s264 + $0x94] sm:$0xf] %vm1361, %v1270
      %1400 = vst.msk [vmem:[%s264 + $0x98] sm:$0xf] %vm1361, %v1271
      %1401 = vst.msk [vmem:[%s264 + $0x9c] sm:$0xf] %vm1361, %v1272
      %1402 = vst.msk [vmem:[%s264 + $0xa0] sm:$0xf] %vm1361, %v1273
      %1403 = vst.msk [vmem:[%s264 + $0xa4] sm:$0xf] %vm1361, %v1274
      %1404 = vst.msk [vmem:[%s264 + $0xa8] sm:$0xf] %vm1361, %v1275
      %1405 = vst.msk [vmem:[%s264 + $0xac] sm:$0xf] %vm1361, %v1276
      %1406 = vst.msk [vmem:[%s264 + $0xb0] sm:$0xf] %vm1361, %v1277
      %1407 = vst.msk [vmem:[%s264 + $0xb4] sm:$0xf] %vm1361, %v1278
      %1408 = vst.msk [vmem:[%s264 + $0xb8] sm:$0xf] %vm1361, %v1279
      %1409 = vst.msk [vmem:[%s264 + $0xbc] sm:$0xf] %vm1361, %v1280
      %1410 = vst.msk [vmem:[%s264 + $0xc0] sm:$0xf] %vm1361, %v1281
      %1411 = vst.msk [vmem:[%s264 + $0xc4] sm:$0xf] %vm1361, %v1282
      %1412 = vst.msk [vmem:[%s264 + $0xc8] sm:$0xf] %vm1361, %v1283
      %1413 = vst.msk [vmem:[%s264 + $0xcc] sm:$0xf] %vm1361, %v1284
      %1414 = vst.msk [vmem:[%s264 + $0xd0] sm:$0xf] %vm1361, %v1285
      %1415 = vst.msk [vmem:[%s264 + $0xd4] sm:$0xf] %vm1361, %v1286
      %1416 = vst.msk [vmem:[%s264 + $0xd8] sm:$0xf] %vm1361, %v1287
      %1417 = vst.msk [vmem:[%s264 + $0xdc] sm:$0xf] %vm1361, %v1288
      %1418 = vst.msk [vmem:[%s264 + $0xe0] sm:$0xf] %vm1361, %v1289
      %1419 = vst.msk [vmem:[%s264 + $0xe4] sm:$0xf] %vm1361, %v1290
      %1420 = vst.msk [vmem:[%s264 + $0xe8] sm:$0xf] %vm1361, %v1291
      %1421 = vst.msk [vmem:[%s264 + $0xec] sm:$0xf] %vm1361, %v1292
      %1422 = vst.msk [vmem:[%s264 + $0xf0] sm:$0xf] %vm1361, %v1293
      %1423 = vst.msk [vmem:[%s264 + $0xf4] sm:$0xf] %vm1361, %v1294
      %1424 = vst.msk [vmem:[%s264 + $0xf8] sm:$0xf] %vm1361, %v1295
      %1425 = vst.msk [vmem:[%s264 + $0xfc] sm:$0xf] %vm1361, %v1296
      %s1426 = smul.u32 64, %s19
      %p1427 = scmp.lt.s32.totalorder %s1426, 255
      %s1428 = scalar_select %p1427, %s1426, 255
      %p1429 = scmp.lt.s32.totalorder %s20, 0
      %s1430 = scalar_select %p1429, %s20, 0
      %s1431 = sadd.s32 %s1430, %s1428
      %s1432 = smul.addr %s1431, 4
      %s1433 = scalar_lea.vmem %s4, %s1432
      // Predicated region
      $region37: #{tpu_custom_call.1} parent=35 // pred_check
        %p1434 = pneg %p151
      $region38: #{tpu_custom_call.1} parent=35 // pred_check_branch
        %1436 = sbr.rel (%p1434) target = $region40
      $region39: #{tpu_custom_call.1} parent=35 // pred_region
        %s1437 = smul.u32 64, %s19
      $region40: #{tpu_custom_call.1} parent=35 // pred_fallthru
        _
    $region36: #{tpu_custom_call.1} parent=5 // pred_fallthru
      _
    %p1438 = scmp.le.s32.totalorder 2, %s10
    // Predicated region
    $region41: #{tpu_custom_call.1} parent=5 // pred_check
      %p1439 = pneg %p1438
    $region42: #{tpu_custom_call.1} parent=5 // pred_check_branch
      %1441 = sbr.rel (%p1439) target = $region44
    $region43: #{tpu_custom_call.1} parent=5 // pred_region
      %s1442 = ssub.s32 %s10, 2
      // Predicated region
      $region45: #{tpu_custom_call.1} parent=43 // pred_check
        %p1443 = pneg %p157
      $region46: #{tpu_custom_call.1} parent=43 // pred_check_branch
        %1445 = sbr.rel (%p1443) target = $region48
      $region47: #{tpu_custom_call.1} parent=43 // pred_region
        %s1446 = smul.u32 64, %s21
        %p1447 = scmp.lt.s32.totalorder %s1446, 255
        %s1448 = scalar_select %p1447, %s1446, 255
        %p1449 = scmp.lt.s32.totalorder %s22, 0
        %s1450 = scalar_select %p1449, %s22, 0
        %s1451 = sadd.s32 %s1450, %s1448
        %s1452 = smul.addr %s1451, 4
        %s1453 = scalar_lea.vmem %s4, %s1452
      $region48: #{tpu_custom_call.1} parent=43 // pred_fallthru
        _
    $region44: #{tpu_custom_call.1} parent=5 // pred_fallthru
      _
  $region6: #{tpu_custom_call.1} parent=0 // loop_footer
    %s14 = sadd.s32 1, %s10
  $region7: #{tpu_custom_call.1} parent=0 // loop_footer_branch
    %9 = sbr.rel target = $region3
  $region8: #{tpu_custom_call.1} parent=0 // loop_exit
    _

</llo_original>
